<compile_context>
chip_gen: v5e
topology: v5e:2x2
jax: 0.10.0
libtpu: 0.0.40
codegen_flags: <defaults>
</compile_context>

<pallas_src>
import functools
import math

import jax
import jax.numpy as jnp
from jax.experimental import pallas as pl
from jax.experimental.pallas import tpu as pltpu


# Resident expanded scale/bias budget (scale + bias together) for the grouped
# lane-dense BN layout; above this we fall back to the per-row layout.
_LANESCALE_RESIDENT_LIMIT = 4 * 1024 * 1024
_MIN_BYTES_FOR_SPLIT = 2 * 1024 * 1024      # below this, don't force >=2 blocks


# ----------------------------------------------------------------------------
# Hardware-aware budgets
# ----------------------------------------------------------------------------
def _hw_budgets():
    """(vmem_limit_bytes, per-block byte budget), per TPU generation.

    Pallas double-buffers every input/output block, so the elementwise paths
    hold ~4x the block budget in VMEM; the numbers below leave ample headroom
    on v5e/v6e (128 MiB physical) and on v7x (64 MiB physical).
    """
    vmem_cap = None
    try:
        vmem_cap = int(getattr(pltpu.get_tpu_info(), "vmem_capacity_bytes"))
    except Exception:
        vmem_cap = None
    if vmem_cap is None:                      # unknown: safe everywhere
        return 32 * 1024 * 1024, 4 * 1024 * 1024
    if vmem_cap >= 96 * 1024 * 1024:          # v5e / v6e (128 MiB physical)
        return 64 * 1024 * 1024, 8 * 1024 * 1024
    return 48 * 1024 * 1024, 6 * 1024 * 1024  # v7x (64 MiB physical per TC)


# ----------------------------------------------------------------------------
# Tiling helpers
# ----------------------------------------------------------------------------
def _lane_options(L):
    if L % 128 == 0:
        return [t for t in range(128, L + 1, 128) if L % t == 0]
    return [L]                                 # unaligned: must take the full dim


def _row_options(R):
    opts = [r for r in range(8, R + 1, 8) if R % r == 0]
    if not opts or opts[-1] != R:
        opts.append(R)                         # full dim is always legal
    return opts


def _batch_options(NB):
    return [n for n in range(1, NB + 1) if NB % n == 0]


def _choose_tiles(NB, R, L, itemsize, budget, reduce_lanes=False):
    """Pick (nb_blk, r_blk, l_blk) for a (NB, R, L) array.

    l_blk is a multiple of 128 (or full L) and r_blk a multiple of 8 (or full
    R), so every BlockSpec satisfies the (8, 128) tiling rule.  Tiles grow
    greedily (lanes first -> longest contiguous DMA runs) under `budget`
    (VMEM-padded bytes).  For big tensors at least two blocks are kept on a
    *parallel* axis so v7x can shard the grid across its two TensorCores.
    """
    spad = 8 * max(1, 4 // itemsize)           # sublane packing quantum

    def blk_bytes(nb, r, l):
        return nb * (-(-r // spad) * spad) * (-(-l // 128) * 128) * itemsize

    lanes, rows = _lane_options(L), _row_options(R)
    l_blk, r_blk, nb_blk = lanes[0], rows[0], 1
    for l in lanes:
        if blk_bytes(nb_blk, r_blk, l) <= budget:
            l_blk = l
    for r in rows:
        if blk_bytes(nb_blk, r, l_blk) <= budget:
            r_blk = r
    for nb in _batch_options(NB):
        if blk_bytes(nb, r_blk, l_blk) <= budget:
            nb_blk = nb

    if blk_bytes(NB, R, L) > _MIN_BYTES_FOR_SPLIT:
        def n_parallel():
            p = (NB // nb_blk) * (R // r_blk)
            if not reduce_lanes:
                p *= L // l_blk
            return p

        if n_parallel() < 2 and nb_blk > 1:
            nb_blk = max(n for n in _batch_options(NB) if n <= nb_blk // 2)
        if n_parallel() < 2:
            smaller = [r for r in rows if r < r_blk]
            if smaller:
                r_blk = smaller[-1]
        if n_parallel() < 2 and not reduce_lanes:
            smaller = [l for l in lanes if l < l_blk]
            if smaller:
                l_blk = smaller[-1]
        # TODO(synk): single-image avgpool with an unsplittable row dim still
        # runs on one core; a finer C-group axis would need segmented tiles.
    return nb_blk, r_blk, l_blk


def _fold_batch(N, C, itemsize):
    """Batch elements folded into the row (sublane) axis so bnf*C approaches a
    multiple of the dtype's sublane packing when C alone is small/unaligned."""
    spad = 8 * max(1, 4 // itemsize)
    want = spad // math.gcd(C, spad)
    return math.gcd(N, want)


# ----------------------------------------------------------------------------
# Kernels (blocks are (nb, rows, lanes); rows = channels (x batch fold))
# ----------------------------------------------------------------------------
def _relu_kernel(x_ref, o_ref):
    o_ref[...] = jnp.maximum(x_ref[...], 0)


def _affine_relu_rowscale_kernel(x_ref, s_ref, b_ref, o_ref):
    # Eval-mode BN folded into per-row scale/bias; math in f32, cast on store.
    x = x_ref[...].astype(jnp.float32)             # (nb, r, l)
    s = s_ref[...][None, :, :]                     # (1, r, 1) f32
    b = b_ref[...][None, :, :]
    o_ref[...] = jnp.maximum(x * s + b, 0.0).astype(o_ref.dtype)


def _affine_relu_lanescale_kernel(x_ref, s_ref, b_ref, o_ref, *, r_blk, l_blk):
    # Lane-dense grouped layout: expanded scale/bias are fully resident in
    # VMEM (constant block index -> one DMA); slice this block's window with
    # aligned dynamic slices.
    ro = pl.multiple_of(pl.program_id(1) * r_blk, r_blk)
    lo = pl.multiple_of(pl.program_id(2) * l_blk, l_blk)
    s = s_ref[pl.ds(ro, r_blk), pl.ds(lo, l_blk)][None, :, :]
    b = b_ref[pl.ds(ro, r_blk), pl.ds(lo, l_blk)][None, :, :]
    x = x_ref[...].astype(jnp.float32)
    o_ref[...] = jnp.maximum(x * s + b, 0.0).astype(o_ref.dtype)


def _affine_relu_avgpool_kernel(x_ref, s_ref, b_ref, o_ref, acc_ref, *,
                                inv_hw, lane_chunk):
    t = pl.program_id(2)

    @pl.when(t == 0)
    def _():
        acc_ref[...] = jnp.zeros_like(acc_ref)

    x = x_ref[...].astype(jnp.float32)             # (nb, r, l)
    s = s_ref[...][None, :, :]
    b = b_ref[...][None, :, :]
    y = jnp.maximum(x * s + b, 0.0)
    # Lane-shaped accumulator: steady state is pure VPU adds; the one
    # cross-lane (XLU) reduction is deferred to the finalize step.
    part = y[:, :, 0:lane_chunk]
    for k in range(1, y.shape[-1] // lane_chunk):
        part = part + y[:, :, k * lane_chunk:(k + 1) * lane_chunk]
    acc_ref[...] += part

    @pl.when(t == pl.num_programs(2) - 1)
    def _():
        o_ref[...] = (jnp.sum(acc_ref[...], axis=2, keepdims=True)
                      * inv_hw).astype(o_ref.dtype)


def _relu_avgpool_kernel(x_ref, o_ref, acc_ref, *, inv_hw, lane_chunk):
    t = pl.program_id(2)

    @pl.when(t == 0)
    def _():
        acc_ref[...] = jnp.zeros_like(acc_ref)

    y = jnp.maximum(x_ref[...].astype(jnp.float32), 0.0)
    part = y[:, :, 0:lane_chunk]
    for k in range(1, y.shape[-1] // lane_chunk):
        part = part + y[:, :, k * lane_chunk:(k + 1) * lane_chunk]
    acc_ref[...] += part

    @pl.when(t == pl.num_programs(2) - 1)
    def _():
        o_ref[...] = (jnp.sum(acc_ref[...], axis=2, keepdims=True)
                      * inv_hw).astype(o_ref.dtype)


# ----------------------------------------------------------------------------
# Wrapper (the "module" forward)
# ----------------------------------------------------------------------------
def _fold_bn(params, eps):
    gamma = params["gamma"].astype(jnp.float32)
    beta = params["beta"].astype(jnp.float32)
    mean = params["running_mean"].astype(jnp.float32)
    var = params["running_var"].astype(jnp.float32)
    scale = gamma / jnp.sqrt(var + eps)
    bias = beta - mean * scale
    return scale, bias


def _relu_view(N, C, HW, itemsize):
    """Most lane-dense contiguous view for the position-independent ReLU."""
    if HW % 128 == 0:
        bnf = _fold_batch(N, C, itemsize)
        return N // bnf, bnf * C, HW
    if (C * HW) % 128 == 0:
        bnf = math.gcd(N, 8 * max(1, 4 // itemsize))
        return N // bnf, bnf, C * HW
    bnf = _fold_batch(N, C, itemsize)
    return N // bnf, bnf * C, HW


def relu_neck(x_nchw, params=None, *, avgpool=False, eps=1e-5):
    """Forward pass of ReluNeck.

    x_nchw : (N, C, H, W) array.
    params : None (norm_cfg=None) or dict of BatchNorm buffers/params
             {"gamma", "beta", "running_mean", "running_var"}, each shape (C,),
             applied in eval mode (running stats) -- frozen / inference
             semantics of the PyTorch module.
    avgpool: if True, output is (N, C); otherwise (N, C, H, W).
    """
    N, C, H, W = x_nchw.shape
    HW = H * W
    dtype = x_nchw.dtype
    itemsize = x_nchw.dtype.itemsize
    vmem_limit, budget = _hw_budgets()
    inv_hw = 1.0 / float(HW)

    scale = bias = None
    if params is not None:
        scale, bias = _fold_bn(params, eps)

    # -------------------- avgpool paths (norm? -> relu -> mean over HW) -----
    if avgpool:
        bnf = _fold_batch(N, C, itemsize)
        NB, R = N // bnf, bnf * C
        xv = x_nchw.reshape(NB, R, HW)
        nb, rb, lb = _choose_tiles(NB, R, HW, itemsize, budget, reduce_lanes=True)
        grid = (NB // nb, R // rb, HW // lb)
        lane_chunk = 128 if lb % 128 == 0 else lb
        x_spec = pl.BlockSpec((nb, rb, lb), lambda n, r, t: (n, r, t))
        o_spec = pl.BlockSpec((nb, rb, 1), lambda n, r, t: (n, r, 0))
        s_spec = pl.BlockSpec((rb, 1), lambda n, r, t: (r, 0))
        cp = pltpu.CompilerParams(
            dimension_semantics=("parallel", "parallel", "arbitrary"),
            vmem_limit_bytes=vmem_limit)
        scratch = [pltpu.VMEM((nb, rb, lane_chunk), jnp.float32)]

        if params is not None:
            s_rows = jnp.tile(scale, (bnf,)).reshape(R, 1)
            b_rows = jnp.tile(bias, (bnf,)).reshape(R, 1)
            out = pl.pallas_call(
                functools.partial(_affine_relu_avgpool_kernel,
                                  inv_hw=inv_hw, lane_chunk=lane_chunk),
                out_shape=jax.ShapeDtypeStruct((NB, R, 1), dtype),
                grid_spec=pltpu.PrefetchScalarGridSpec(
                    num_scalar_prefetch=0, grid=grid,
                    in_specs=[x_spec, s_spec, s_spec],
                    out_specs=o_spec, scratch_shapes=scratch),
                compiler_params=cp,
            )(xv, s_rows, b_rows)
        else:
            out = pl.pallas_call(
                functools.partial(_relu_avgpool_kernel,
                                  inv_hw=inv_hw, lane_chunk=lane_chunk),
                out_shape=jax.ShapeDtypeStruct((NB, R, 1), dtype),
                grid_spec=pltpu.PrefetchScalarGridSpec(
                    num_scalar_prefetch=0, grid=grid,
                    in_specs=[x_spec], out_specs=o_spec,
                    scratch_shapes=scratch),
                compiler_params=cp,
            )(xv)
        return out.reshape(N, C)

    # -------------------- elementwise paths (output keeps NCHW) -------------
    # TODO(synk): when this neck follows a conv/matmul in the same jit, the
    # norm_cfg=None / pure-affine cases are better left to XLA epilogue fusion
    # (saves one full HBM round trip); the Pallas kernels below are one pass.
    cp = pltpu.CompilerParams(
        dimension_semantics=("parallel", "parallel", "parallel"),
        vmem_limit_bytes=vmem_limit)

    if params is not None:
        g = 128 // math.gcd(HW, 128)
        lanescale_ok = (g > 1 and C % g == 0
                        and 2 * C * HW * 4 <= _LANESCALE_RESIDENT_LIMIT)
        if lanescale_ok:
            # Lane-dense grouped view (N, C//g, g*HW); last dim % 128 == 0.
            Rg, Lg = C // g, g * HW
            xg = x_nchw.reshape(N, Rg, Lg)
            s_e = jnp.broadcast_to(scale[:, None], (C, HW)).reshape(Rg, Lg)
            b_e = jnp.broadcast_to(bias[:, None], (C, HW)).reshape(Rg, Lg)
            nb, rb, lb = _choose_tiles(N, Rg, Lg, itemsize, budget)
            grid = (N // nb, Rg // rb, Lg // lb)
            x_spec = pl.BlockSpec((nb, rb, lb), lambda n, r, t: (n, r, t))
            sb_spec = pl.BlockSpec((Rg, Lg), lambda n, r, t: (0, 0))  # resident
            out = pl.pallas_call(
                functools.partial(_affine_relu_lanescale_kernel,
                                  r_blk=rb, l_blk=lb),
                out_shape=jax.ShapeDtypeStruct((N, Rg, Lg), dtype),
                grid_spec=pltpu.PrefetchScalarGridSpec(
                    num_scalar_prefetch=0, grid=grid,
                    in_specs=[x_spec, sb_spec, sb_spec],
                    out_specs=x_spec),
                compiler_params=cp,
            )(xg, s_e, b_e)
            return out.reshape(N, C, H, W)

        # Per-row scale layout (lanes = HW; batch folded into rows if C small).
        bnf = _fold_batch(N, C, itemsize)
        NB, R = N // bnf, bnf * C
        xv = x_nchw.reshape(NB, R, HW)
        s_rows = jnp.tile(scale, (bnf,)).reshape(R, 1)
        b_rows = jnp.tile(bias, (bnf,)).reshape(R, 1)
        nb, rb, lb = _choose_tiles(NB, R, HW, itemsize, budget)
        grid = (NB // nb, R // rb, HW // lb)
        x_spec = pl.BlockSpec((nb, rb, lb), lambda n, r, t: (n, r, t))
        s_spec = pl.BlockSpec((rb, 1), lambda n, r, t: (r, 0))
        out = pl.pallas_call(
            _affine_relu_rowscale_kernel,
            out_shape=jax.ShapeDtypeStruct((NB, R, HW), dtype),
            grid_spec=pltpu.PrefetchScalarGridSpec(
                num_scalar_prefetch=0, grid=grid,
                in_specs=[x_spec, s_spec, s_spec],
                out_specs=x_spec),
            compiler_params=cp,
        )(xv, s_rows, b_rows)
        return out.reshape(N, C, H, W)

    # norm_cfg=None: plain ReLU on the most lane-dense contiguous view.
    NB, R, L = _relu_view(N, C, HW, itemsize)
    xv = x_nchw.reshape(NB, R, L)
    nb, rb, lb = _choose_tiles(NB, R, L, itemsize, budget)
    grid = (NB // nb, R // rb, L // lb)
    x_spec = pl.BlockSpec((nb, rb, lb), lambda n, r, t: (n, r, t))
    out = pl.pallas_call(
        _relu_kernel,
        out_shape=jax.ShapeDtypeStruct((NB, R, L), dtype),
        grid_spec=pltpu.PrefetchScalarGridSpec(
            num_scalar_prefetch=0, grid=grid,
            in_specs=[x_spec], out_specs=x_spec),
        compiler_params=cp,
    )(xv)
    return out.reshape(N, C, H, W)


# ----------------------------------------------------------------------------
# Pure-JAX reference
# ----------------------------------------------------------------------------
def relu_neck_ref(x_nchw, params=None, *, avgpool=False, eps=1e-5):
    x = x_nchw.astype(jnp.float32)
    if params is not None:
        scale = params["gamma"].astype(jnp.float32) / jnp.sqrt(
            params["running_var"].astype(jnp.float32) + eps)
        bias = params["beta"].astype(jnp.float32) - \
            params["running_mean"].astype(jnp.float32) * scale
        x = x * scale[None, :, None, None] + bias[None, :, None, None]
    x = jnp.maximum(x, 0.0)
    if avgpool:
        return jnp.mean(x, axis=(2, 3)).astype(x_nchw.dtype)
    return x.astype(x_nchw.dtype)


# ----------------------------------------------------------------------------
if __name__ == "__main__":
    key = jax.random.PRNGKey(0)

    def make_params(k, C):
        kg, kb, km, kv = jax.random.split(k, 4)
        return {
            "gamma": 1.0 + 0.1 * jax.random.normal(kg, (C,), jnp.float32),
            "beta": 0.1 * jax.random.normal(kb, (C,), jnp.float32),
            "running_mean": 0.1 * jax.random.normal(km, (C,), jnp.float32),
            "running_var": jnp.abs(
                1.0 + 0.1 * jax.random.normal(kv, (C,), jnp.float32)),
        }

    ok = True

    def check(out, ref, shape, atol=1e-5, rtol=1e-5):
        global ok
        out = jax.block_until_ready(out)
        ok &= bool(out.shape == shape)
        ok &= bool(jnp.allclose(out.astype(jnp.float32),
                                ref.astype(jnp.float32), atol=atol, rtol=rtol))

    # --- primary shapes: N=2, C=4, 16x16, f32, all four module configs -------
    k0, k1, k2, k3 = jax.random.split(key, 4)
    N, C, H, W = 2, 4, 16, 16
    x = jax.random.normal(k0, (N, C, H, W), jnp.float32)
    p = make_params(k1, C)

    check(relu_neck(x, p, avgpool=True), relu_neck_ref(x, p, avgpool=True), (N, C))
    check(relu_neck(x, None, avgpool=False), relu_neck_ref(x, None, avgpool=False),
          (N, C, H, W), atol=1e-6, rtol=1e-6)
    check(relu_neck(x, p, avgpool=False), relu_neck_ref(x, p, avgpool=False),
          (N, C, H, W))
    check(relu_neck(x, None, avgpool=True), relu_neck_ref(x, None, avgpool=True),
          (N, C))

    # --- lane-dense grouped BN path: 7x7 spatial, C multiple of 128 ----------
    N2, C2, H2, W2 = 2, 256, 7, 7
    x2 = jax.random.normal(k2, (N2, C2, H2, W2), jnp.float32)
    p2 = make_params(k3, C2)
    check(relu_neck(x2, p2, avgpool=False), relu_neck_ref(x2, p2, avgpool=False),
          (N2, C2, H2, W2))

    # --- unaligned-HW fallback (small C, 7x7): elementwise + avgpool ---------
    x3 = jax.random.normal(k2, (2, 4, 7, 7), jnp.float32)
    p3 = make_params(k3, 4)
    check(relu_neck(x3, p3, avgpool=False), relu_neck_ref(x3, p3, avgpool=False),
          (2, 4, 7, 7))
    check(relu_neck(x3, p3, avgpool=True), relu_neck_ref(x3, p3, avgpool=True),
          (2, 4))

    # --- bf16 input, f32 BN math, cast on store ------------------------------
    xb = x.astype(jnp.bfloat16)
    check(relu_neck(xb, p, avgpool=False), relu_neck_ref(xb, p, avgpool=False),
          (N, C, H, W), atol=2e-2, rtol=2e-2)

    print("KERNEL_OK" if ok else "MISMATCH")
</pallas_src>

<mosaic_0001>
module attributes {stable_mosaic.version = 11 : i64} {
  func.func @_affine_relu_avgpool_kernel(%arg0: i32, %arg1: i32, %arg2: i32, %arg3: memref<1x8x256xf32, #tpu.memory_space<vmem>>, %arg4: memref<8x1xf32, #tpu.memory_space<vmem>>, %arg5: memref<8x1xf32, #tpu.memory_space<vmem>>, %arg6: memref<1x8x1xf32, #tpu.memory_space<vmem>>, %arg7: memref<1x8x128xf32, #tpu.memory_space<vmem>>) attributes {dimension_semantics = [#tpu.dimension_semantics<parallel>, #tpu.dimension_semantics<parallel>, #tpu.dimension_semantics<arbitrary>], iteration_bounds = array<i64: 1, 1, 1>, scalar_prefetch = 0 : i64, scratch_operands = 1 : i64, tpu.core_type = #tpu.core_type<tc>, window_params = [{transform_indices = @transform_0, window_bounds = array<i64: 1, 8, 256>}, {transform_indices = @transform_1, window_bounds = array<i64: 8, 1>}, {transform_indices = @transform_2, window_bounds = array<i64: 8, 1>}, {transform_indices = @transform_3, window_bounds = array<i64: 1, 8, 1>}]} {
    %c0_i32 = arith.constant 0 : i32
    %0 = arith.cmpi eq, %arg2, %c0_i32 : i32
    %1 = arith.extui %0 : i1 to i32
    %c0_i32_0 = arith.constant 0 : i32
    %2 = arith.cmpi ne, %1, %c0_i32_0 : i32
    scf.if %2 {
      %cst_15 = arith.constant 0.000000e+00 : f32
      %23 = vector.broadcast %cst_15 : f32 to vector<1x8x128xf32>
      %c0_16 = arith.constant 0 : index
      %c0_17 = arith.constant 0 : index
      %c0_18 = arith.constant 0 : index
      %24 = vector.load %arg7[%c0_16, %c0_17, %c0_18] : memref<1x8x128xf32, #tpu.memory_space<vmem>>, vector<1x8x128xf32>
      tpu.vector_store %arg7[%c0_16, %c0_17, %c0_18], %23 {strides = array<i32>} : memref<1x8x128xf32, #tpu.memory_space<vmem>>, vector<1x8x128xf32>,
    } else {
    }
    %c0 = arith.constant 0 : index
    %c0_1 = arith.constant 0 : index
    %c0_2 = arith.constant 0 : index
    %3 = vector.load %arg3[%c0, %c0_1, %c0_2] : memref<1x8x256xf32, #tpu.memory_space<vmem>>, vector<1x8x256xf32>
    %c0_3 = arith.constant 0 : index
    %c0_4 = arith.constant 0 : index
    %4 = vector.load %arg4[%c0_3, %c0_4] : memref<8x1xf32, #tpu.memory_space<vmem>>, vector<8x1xf32>
    %5 = vector.shape_cast %4 : vector<8x1xf32> to vector<1x8x1xf32>
    %c0_5 = arith.constant 0 : index
    %c0_6 = arith.constant 0 : index
    %6 = vector.load %arg5[%c0_5, %c0_6] : memref<8x1xf32, #tpu.memory_space<vmem>>, vector<8x1xf32>
    %7 = vector.shape_cast %6 : vector<8x1xf32> to vector<1x8x1xf32>
    %8 = vector.broadcast %5 : vector<1x8x1xf32> to vector<1x8x256xf32>
    %9 = arith.mulf %3, %8 : vector<1x8x256xf32>
    %10 = vector.broadcast %7 : vector<1x8x1xf32> to vector<1x8x256xf32>
    %11 = arith.addf %9, %10 : vector<1x8x256xf32>
    %cst = arith.constant 0.000000e+00 : f32
    %12 = vector.broadcast %cst : f32 to vector<1x8x256xf32>
    %13 = arith.maximumf %11, %12 : vector<1x8x256xf32>
    %14 = vector.extract_strided_slice %13 {offsets = [0, 0, 0], sizes = [1, 8, 128], strides = [1, 1, 1]} : vector<1x8x256xf32> to vector<1x8x128xf32>
    %15 = vector.extract_strided_slice %13 {offsets = [0, 0, 128], sizes = [1, 8, 128], strides = [1, 1, 1]} : vector<1x8x256xf32> to vector<1x8x128xf32>
    %16 = arith.addf %14, %15 : vector<1x8x128xf32>
    %c0_7 = arith.constant 0 : index
    %c0_8 = arith.constant 0 : index
    %c0_9 = arith.constant 0 : index
    %17 = vector.load %arg7[%c0_7, %c0_8, %c0_9] : memref<1x8x128xf32, #tpu.memory_space<vmem>>, vector<1x8x128xf32>
    %18 = arith.addf %17, %16 : vector<1x8x128xf32>
    %c0_10 = arith.constant 0 : index
    %c0_11 = arith.constant 0 : index
    %c0_12 = arith.constant 0 : index
    %19 = vector.load %arg7[%c0_10, %c0_11, %c0_12] : memref<1x8x128xf32, #tpu.memory_space<vmem>>, vector<1x8x128xf32>
    tpu.vector_store %arg7[%c0_10, %c0_11, %c0_12], %18 {strides = array<i32>} : memref<1x8x128xf32, #tpu.memory_space<vmem>>, vector<1x8x128xf32>,
    %c0_i32_13 = arith.constant 0 : i32
    %20 = arith.cmpi eq, %arg2, %c0_i32_13 : i32
    %21 = arith.extui %20 : i1 to i32
    %c0_i32_14 = arith.constant 0 : i32
    %22 = arith.cmpi ne, %21, %c0_i32_14 : i32
    scf.if %22 {
      %c0_15 = arith.constant 0 : index
      %c0_16 = arith.constant 0 : index
      %c0_17 = arith.constant 0 : index
      %23 = vector.load %arg7[%c0_15, %c0_16, %c0_17] : memref<1x8x128xf32, #tpu.memory_space<vmem>>, vector<1x8x128xf32>
      %cst_18 = arith.constant dense<0.000000e+00> : vector<1x8xf32>
      %24 = vector.multi_reduction <add>, %23, %cst_18 [2] : vector<1x8x128xf32> to vector<1x8xf32>
      %25 = vector.shape_cast %24 : vector<1x8xf32> to vector<1x8x1xf32>
      %cst_19 = arith.constant 3.906250e-03 : f32
      %26 = vector.broadcast %cst_19 : f32 to vector<1x8x1xf32>
      %27 = arith.mulf %25, %26 : vector<1x8x1xf32>
      %c0_20 = arith.constant 0 : index
      %c0_21 = arith.constant 0 : index
      %c0_22 = arith.constant 0 : index
      %28 = vector.load %arg6[%c0_20, %c0_21, %c0_22] : memref<1x8x1xf32, #tpu.memory_space<vmem>>, vector<1x8x1xf32>
      tpu.vector_store %arg6[%c0_20, %c0_21, %c0_22], %27 {strides = array<i32>} : memref<1x8x1xf32, #tpu.memory_space<vmem>>, vector<1x8x1xf32>,
    } else {
    }
    return
  }
  func.func @transform_0(%arg0: i32, %arg1: i32, %arg2: i32) -> (i32, i32, i32) {
    %c0_i32 = arith.constant 0 : i32
    return %arg0, %arg1, %arg2 : i32, i32, i32
  }
  func.func @transform_1(%arg0: i32, %arg1: i32, %arg2: i32) -> (i32, i32) {
    %c0_i32 = arith.constant 0 : i32
    %c0_i32_0 = arith.constant 0 : i32
    return %arg1, %c0_i32 : i32, i32
  }
  func.func @transform_2(%arg0: i32, %arg1: i32, %arg2: i32) -> (i32, i32) {
    %c0_i32 = arith.constant 0 : i32
    %c0_i32_0 = arith.constant 0 : i32
    return %arg1, %c0_i32 : i32, i32
  }
  func.func @transform_3(%arg0: i32, %arg1: i32, %arg2: i32) -> (i32, i32, i32) {
    %c0_i32 = arith.constant 0 : i32
    %c0_i32_0 = arith.constant 0 : i32
    return %arg0, %arg1, %c0_i32 : i32, i32, i32
  }
}

</mosaic_0001>

<llo_original>
// kernel: tpu_custom_call.1
$region0: #{tpu_custom_call.1}
  #allocation0 [shape = 'u32[]', space=smem, size = 0x4, offset = 0x4, fixed_abs, tag = 'smem constant byte address 0x4 - core index']
  #allocation1 [shape = 'u32[72,128]{1,0:T(1,128)}', space=vmem, size = 0x9000, scoped, tag = 'internal scratch']
  #allocation2 [shape = 'f32[1,8,128]{2,1,0:T(8,128)}', space=vmem, size = 0x1000, scoped, tag = 'scratch operand']
  %s0 = inlined_call_operand.vmem [shape: f32[1,8,256], index: 0, kind: input, shape index: {}]
  %s1 = inlined_call_operand.vmem [shape: f32[8,1], index: 1, kind: input, shape index: {}]
  %s2 = inlined_call_operand.vmem [shape: f32[8,1], index: 2, kind: input, shape index: {}]
  %s3 = inlined_call_operand.vmem [shape: f32[1,8,1], index: 3, kind: output, shape index: {}]
  %s4 = sld [smem:[#allocation0]]
  $region30: #{tpu_custom_call.1} parent=0
    _
  %s6 = ssub.s32 1, %s4
  %s7 = scalar_select 0, %s6, %s4
  // Predicated region
  $region2: #{tpu_custom_call.1} parent=0 // pred_check
    _
  $region3: #{tpu_custom_call.1} parent=0 // pred_check_branch
    %9 = sbr.rel (0) target = $region5
  $region4: #{tpu_custom_call.1} parent=0 // pred_region
    _
  $region5: #{tpu_custom_call.1} parent=0 // pred_fallthru
    _
  // Predicated region
  $region6: #{tpu_custom_call.1} parent=0 // pred_check
    _
  $region7: #{tpu_custom_call.1} parent=0 // pred_check_branch
    %11 = sbr.rel (0) target = $region9
  $region8: #{tpu_custom_call.1} parent=0 // pred_region
    _
  $region9: #{tpu_custom_call.1} parent=0 // pred_fallthru
    _
  // Predicated region
  $region10: #{tpu_custom_call.1} parent=0 // pred_check
    _
  $region11: #{tpu_custom_call.1} parent=0 // pred_check_branch
    %13 = sbr.rel (0) target = $region13
  $region12: #{tpu_custom_call.1} parent=0 // pred_region
    _
  $region13: #{tpu_custom_call.1} parent=0 // pred_fallthru
    _
  %p14 = scmp.eq.s32.totalorder 0, 0
  // Predicated region
  $region14: #{tpu_custom_call.1} parent=0 // pred_check
    %p15 = pneg %p14
  $region15: #{tpu_custom_call.1} parent=0 // pred_check_branch
    %17 = sbr.rel (%p15) target = $region17
  $region16: #{tpu_custom_call.1} parent=0 // pred_region
    %18 = vst [vmem:[#allocation2] sm:$0xff] 0.0
  $region17: #{tpu_custom_call.1} parent=0 // pred_fallthru
    _
  %v19 = vld [vmem:[%s0] sm:$0xff]
  %v20 = vld [vmem:[%s0 + $0x8] sm:$0xff]
  %v21 = vld [vmem:[%s1] sm:$0xff]
  %v22 = vld [vmem:[%s2] sm:$0xff]
  %24 = vset.pattern.permute.xlu0 0
  %25 = vperm.xlu0 %24, %v21
  %v26 = vpop.permute.xlu0 %25
  %v28 = vmul.f32 %v19, %v26
  %v29 = vmul.f32 %v20, %v26
  %31 = vset.pattern.permute.xlu0 0
  %32 = vperm.xlu0 %31, %v22
  %v33 = vpop.permute.xlu0 %32
  %v35 = vadd.f32 %v28, %v33
  %v36 = vadd.f32 %v29, %v33
  %v37 = vmax.f32 %v35, 0.0
  %v38 = vmax.f32 %v36, 0.0
  %v39 = vadd.f32 %v37, %v38
  %v40 = vld [vmem:[#allocation2] sm:$0xff]
  %v41 = vadd.f32 %v40, %v39
  %42 = vst [vmem:[#allocation2] sm:$0xff] %v41
  // Predicated region
  $region18: #{tpu_custom_call.1} parent=0 // pred_check
    %p43 = pneg %p14
  $region19: #{tpu_custom_call.1} parent=0 // pred_check_branch
    %45 = sbr.rel (%p43) target = $region21
  $region20: #{tpu_custom_call.1} parent=0 // pred_region
    %v46 = vld [vmem:[#allocation2] sm:$0xff]
    %47 = vadd.xlane.f32.xlu0 %v46
    %v48 = vpop.xlane.xlu0 %47
    %v49 = vmul.f32 %v48, 0.00390625
    %vm50 = vcmask 7168
    %51 = vst.msk [vmem:[%s3] sm:$0xff] %vm50, %v49
  $region21: #{tpu_custom_call.1} parent=0 // pred_fallthru
    _
  // Predicated region
  $region22: #{tpu_custom_call.1} parent=0 // pred_check
    _
  $region23: #{tpu_custom_call.1} parent=0 // pred_check_branch
    %53 = sbr.rel (0) target = $region25
  $region24: #{tpu_custom_call.1} parent=0 // pred_region
    _
  $region25: #{tpu_custom_call.1} parent=0 // pred_fallthru
    _
  // Predicated region
  $region26: #{tpu_custom_call.1} parent=0 // pred_check
    _
  $region27: #{tpu_custom_call.1} parent=0 // pred_check_branch
    %55 = sbr.rel (0) target = $region29
  $region28: #{tpu_custom_call.1} parent=0 // pred_region
    _
  $region29: #{tpu_custom_call.1} parent=0 // pred_fallthru
    _

</llo_original>
